<compile_context>
chip_gen: v5e
topology: v5e:2x2
jax: 0.10.0
libtpu: 0.0.40
codegen_flags: <defaults>
</compile_context>

<pallas_src>
import functools

import jax
import jax.numpy as jnp
from jax import lax
from jax.experimental import pallas as pl
from jax.experimental.pallas import tpu as pltpu


# ----------------------------------------------------------------------------
# Helpers
# ----------------------------------------------------------------------------
def _round_up(v, m):
    return (v + m - 1) // m * m


def _vmem_capacity_bytes():
    try:
        return int(pltpu.get_tpu_info().vmem_capacity_bytes)
    except Exception:
        return 64 * 1024 * 1024        # conservative fallback: v7x per-core VMEM


_VMEM_CAP = _vmem_capacity_bytes()
_VMEM_LIMIT = int(_VMEM_CAP * 0.85)    # explicit scoped-VMEM limit for pallas_call


# ----------------------------------------------------------------------------
# Fused two-layer kernel (whole graph resident in VMEM; adj read once)
# ----------------------------------------------------------------------------
def _gcn_fused_kernel(adj_ref, feat_ref, dis_ref, w1_ref, b1_ref, w2_ref,
                      b2_ref, out_ref, *, num_classes, project_l1):
    """Both GCN layers in one kernel.

    adj_ref : [N, N]  int8   A_hat = A + I (self loop folded in)
    feat_ref: [N, F0] bf16   D^-1/2 X      (project_l1=True)
                             D^-1/2 X W1   (project_l1=False, i.e. F > hidden)
    dis_ref : [N, 1]  f32    d^-1/2
    """
    adj = adj_ref[...].astype(jnp.float32).astype(jnp.bfloat16)    # i8 -> bf16
    dis = dis_ref[...]                                             # [N, 1] f32

    # ---- layer 1: hs = D^-1/2 relu(A_norm X W1 + b1) -----------------------
    agg1 = jnp.dot(adj, feat_ref[...], preferred_element_type=jnp.float32)
    agg1 = dis * agg1                                              # left D^-1/2 (f32)
    if project_l1:
        z1 = jnp.dot(agg1.astype(jnp.bfloat16), w1_ref[...],
                     preferred_element_type=jnp.float32) + b1_ref[...]
    else:
        z1 = agg1 + b1_ref[...]
    hs = (dis * jnp.maximum(z1, 0.0)).astype(jnp.bfloat16)         # pre-scaled for L2

    # ---- layer 2: log_softmax(A_norm h W2 + b2) ----------------------------
    agg2 = jnp.dot(adj, hs, preferred_element_type=jnp.float32)
    z2 = jnp.dot((dis * agg2).astype(jnp.bfloat16), w2_ref[...],
                 preferred_element_type=jnp.float32) + b2_ref[...]

    col = lax.broadcasted_iota(jnp.int32, z2.shape, 1)
    z2 = jnp.where(col < num_classes, z2, jnp.float32(-1e30))
    zmax = jnp.max(z2, axis=1, keepdims=True)
    zs = z2 - zmax
    lse = jnp.log(jnp.sum(jnp.exp(zs), axis=1, keepdims=True))
    out_ref[...] = zs - lse


# ----------------------------------------------------------------------------
# Tiled single-layer kernel (rows "parallel" x contraction "arbitrary")
# ----------------------------------------------------------------------------
def _gcn_layer_tiled_kernel(adj_ref, feat_ref, dis_ref, w_ref, b_ref, out_ref,
                            acc_ref, *, project, final_log_softmax, num_classes):
    """One (row-tile, K-tile) step of one GCN layer.

    adj_ref : [TM, TK] int8   block of A_hat
    feat_ref: [TK, F]  bf16   dis-scaled features of this K-block's nodes
    dis_ref : [TM, 1]  f32    d^-1/2 of this row tile
    acc_ref : [TM, F]  f32    aggregation accumulator (VMEM scratch)
    """
    k = pl.program_id(1)

    @pl.when(k == 0)
    def _():
        acc_ref[...] = jnp.zeros_like(acc_ref)

    adj = adj_ref[...].astype(jnp.float32).astype(jnp.bfloat16)    # i8 -> bf16
    acc_ref[...] += jnp.dot(adj, feat_ref[...],
                            preferred_element_type=jnp.float32)

    @pl.when(k == pl.num_programs(1) - 1)
    def _():
        dis_r = dis_ref[...]                                       # [TM, 1]
        agg = dis_r * acc_ref[...]                                 # left D^-1/2 (f32)
        if project:
            z = jnp.dot(agg.astype(jnp.bfloat16), w_ref[...],
                        preferred_element_type=jnp.float32) + b_ref[...]
        else:
            z = agg + b_ref[...]
        if final_log_softmax:
            col = lax.broadcasted_iota(jnp.int32, z.shape, 1)
            z = jnp.where(col < num_classes, z, jnp.float32(-1e30))
            zmax = jnp.max(z, axis=1, keepdims=True)
            zs = z - zmax
            lse = jnp.log(jnp.sum(jnp.exp(zs), axis=1, keepdims=True))
            out_ref[...] = (zs - lse).astype(out_ref.dtype)
        else:
            # ReLU; store dis-scaled so layer 2 aggregates it directly.
            out_ref[...] = (dis_r * jnp.maximum(z, 0.0)).astype(out_ref.dtype)


def _pick_tiles(n_pad, fin, out_row_bytes, budget_bytes):
    """(TM, TK): TK a multiple of 128, TM a multiple of 32 (int8 sublane tile),
    biggest TM fitting the VMEM budget while keeping >= 8 row grid steps
    (v7x megacore sharding + pipelining)."""
    tk = 512 if (n_pad >= 4096 and n_pad % 512 == 0) else 256
    if n_pad % tk:
        tk = n_pad                       # small graph: full contraction axis
    for tm in (1024, 512, 256, 128, 64, 32):
        if n_pad % tm:
            continue
        if tm > 32 and n_pad // tm < 8:
            continue
        need = (2 * tm * tk              # int8 adjacency block, double buffered
                + 2 * tk * fin * 2       # bf16 feature K-block, double buffered
                + tm * fin * 4           # f32 accumulator scratch
                + 2 * tm * out_row_bytes # output block, double buffered
                + 2 * tm * 4             # dis rows
                + (1 << 20))             # weights / bias / headroom
        if need <= budget_bytes:
            return tm, tk
    return 32, tk


def _gcn_layer_tiled(adj_i8, feat, dis, w, b, *, out_width, out_dtype, project,
                     final_log_softmax, num_classes):
    n_pad = adj_i8.shape[0]
    fin = feat.shape[1]
    out_row_bytes = out_width * jnp.dtype(out_dtype).itemsize
    tm, tk = _pick_tiles(n_pad, fin, out_row_bytes, int(_VMEM_LIMIT * 0.8))
    grid = (n_pad // tm, n_pad // tk)

    kern = functools.partial(_gcn_layer_tiled_kernel, project=project,
                             final_log_softmax=final_log_softmax,
                             num_classes=num_classes)
    return pl.pallas_call(
        kern,
        out_shape=jax.ShapeDtypeStruct((n_pad, out_width), out_dtype),
        grid=grid,
        in_specs=[
            pl.BlockSpec((tm, tk), lambda i, k: (i, k)),     # A_hat block (int8)
            pl.BlockSpec((tk, fin), lambda i, k: (k, 0)),    # dis-scaled features
            pl.BlockSpec((tm, 1), lambda i, k: (i, 0)),      # d^-1/2 rows
            pl.BlockSpec(w.shape, lambda i, k: (0, 0)),      # W   (invariant)
            pl.BlockSpec(b.shape, lambda i, k: (0, 0)),      # b   (invariant)
        ],
        out_specs=pl.BlockSpec((tm, out_width), lambda i, k: (i, 0)),
        scratch_shapes=[pltpu.VMEM((tm, fin), jnp.float32)],
        compiler_params=pltpu.CompilerParams(
            dimension_semantics=("parallel", "arbitrary"),
            vmem_limit_bytes=_VMEM_LIMIT),
    )(adj_i8, feat, dis, w, b)


# ----------------------------------------------------------------------------
# Wrapper
# ----------------------------------------------------------------------------
@functools.partial(jax.jit, static_argnames=("force_tiled",))
def gcn_net_forward(x, adj, w1, b1, w2, b2, *, force_tiled=False):
    """x: [N, F] f32, adj: [N, N] raw 0/1 adjacency (no self loops)."""
    n, f = x.shape
    hidden = w1.shape[1]
    classes = w2.shape[1]
    c_pad = _round_up(classes, 128)

    # -- tiny host-side precompute; all heavy math stays in the kernels ------
    deg = jnp.sum(adj, axis=1) + 1.0                     # + self loop
    dis = lax.rsqrt(deg.astype(jnp.float32)).reshape(n, 1)
    adj_hat = (adj + jnp.eye(n, dtype=adj.dtype)).astype(jnp.int8)  # 1 B/elem

    xs = dis * x.astype(jnp.float32)                     # right D^-1/2 folded in
    project_l1 = f <= hidden                             # aggregate-then-project
    if project_l1:
        feat0 = xs.astype(jnp.bfloat16)                  # [N, F]
    else:
        # project-then-aggregate: the [N,N] aggregation contracts over `hidden`
        feat0 = jnp.dot(xs, w1.astype(jnp.float32)).astype(jnp.bfloat16)

    w1_bf = w1.astype(jnp.bfloat16)
    b1_f = b1.astype(jnp.float32).reshape(1, hidden)
    w2_pad = jnp.zeros((hidden, c_pad), jnp.bfloat16).at[:, :classes].set(
        w2.astype(jnp.bfloat16))
    b2_pad = jnp.zeros((1, c_pad), jnp.float32).at[:, :classes].set(
        b2.astype(jnp.float32).reshape(1, classes))

    # -- fused single-call path when everything (incl. the in-kernel bf16
    #    upcast of the adjacency) fits the per-core VMEM budget --------------
    f0 = feat0.shape[1]
    fused_need = (3 * n * n                               # i8 adj + bf16 upcast
                  + 4 * n * (f0 + hidden + c_pad) * 4     # f32 temporaries
                  + (2 << 20))                            # weights / headroom
    if (not force_tiled) and fused_need <= int(_VMEM_LIMIT * 0.7):
        out_pad = pl.pallas_call(
            functools.partial(_gcn_fused_kernel, num_classes=classes,
                              project_l1=project_l1),
            out_shape=jax.ShapeDtypeStruct((n, c_pad), jnp.float32),
            compiler_params=pltpu.CompilerParams(vmem_limit_bytes=_VMEM_LIMIT),
        )(adj_hat, feat0, dis, w1_bf, b1_f, w2_pad, b2_pad)
        return out_pad[:, :classes]

    # -- tiled two-kernel path ------------------------------------------------
    n_pad = _round_up(n, 256)            # int8 sublane (32) / lane (128) tiling
    if n_pad != n:
        p = n_pad - n
        adj_hat = jnp.pad(adj_hat, ((0, p), (0, p)))
        feat0 = jnp.pad(feat0, ((0, p), (0, 0)))
        dis = jnp.pad(dis, ((0, p), (0, 0)), constant_values=1.0)

    hs = _gcn_layer_tiled(adj_hat, feat0, dis, w1_bf, b1_f,
                          out_width=hidden, out_dtype=jnp.bfloat16,
                          project=project_l1, final_log_softmax=False,
                          num_classes=classes)
    out_pad = _gcn_layer_tiled(adj_hat, hs, dis, w2_pad, b2_pad,
                               out_width=c_pad, out_dtype=jnp.float32,
                               project=True, final_log_softmax=True,
                               num_classes=classes)
    return out_pad[:n, :classes]


def init_params(key, features, hidden, classes):
    """Deterministic glorot-uniform weights, zero biases (GCNConv defaults)."""
    k1, k2 = jax.random.split(key)

    def glorot(k, fan_in, fan_out):
        limit = jnp.sqrt(6.0 / (fan_in + fan_out))
        return jax.random.uniform(k, (fan_in, fan_out), jnp.float32,
                                  minval=-limit, maxval=limit)

    w1 = glorot(k1, features, hidden)
    b1 = jnp.zeros((1, hidden), jnp.float32)
    w2 = glorot(k2, hidden, classes)
    b2 = jnp.zeros((1, classes), jnp.float32)
    return w1, b1, w2, b2


if __name__ == "__main__":
    N, FEATURES, HIDDEN, CLASSES = 64, 16, 32, 8

    key = jax.random.PRNGKey(0)
    kx, kadj, kp = jax.random.split(key, 3)

    x = jax.random.normal(kx, (N, FEATURES), jnp.float32)
    # Random symmetric 0/1 adjacency without self loops.
    a_rand = (jax.random.uniform(kadj, (N, N)) < 0.1).astype(jnp.float32)
    adj = jnp.maximum(a_rand, a_rand.T) * (1.0 - jnp.eye(N, dtype=jnp.float32))

    w1, b1, w2, b2 = init_params(kp, FEATURES, HIDDEN, CLASSES)

    out_fused = gcn_net_forward(x, adj, w1, b1, w2, b2)             # fused path
    out_tiled = gcn_net_forward(x, adj, w1, b1, w2, b2, force_tiled=True)
    jax.block_until_ready((out_fused, out_tiled))

    # f32 dense reference (GCNConv defaults: self loops + symmetric norm).
    a_hat = adj + jnp.eye(N, dtype=jnp.float32)
    d_inv_sqrt = 1.0 / jnp.sqrt(jnp.sum(a_hat, axis=1))
    a_norm = a_hat * d_inv_sqrt[:, None] * d_inv_sqrt[None, :]
    h_ref = jnp.maximum(a_norm @ (x @ w1) + b1, 0.0)
    z_ref = a_norm @ (h_ref @ w2) + b2
    ref = jax.nn.log_softmax(z_ref, axis=1)

    for out in (out_fused, out_tiled):
        assert out.shape == (N, CLASSES)
        # rows of log_softmax must exp-sum to 1
        row_sums = jnp.sum(jnp.exp(out), axis=1)
        assert bool(jnp.all(jnp.abs(row_sums - 1.0) < 1e-4))
        assert bool(jnp.all(jnp.abs(out - ref) < 1e-1))  # bf16-operand tolerance

    print("KERNEL_OK")
</pallas_src>

<mosaic_0001>
module attributes {stable_mosaic.version = 11 : i64} {
  func.func @_gcn_fused_kernel(%arg0: memref<64x64xi8, #tpu.memory_space<vmem>>, %arg1: memref<64x16xbf16, #tpu.memory_space<vmem>>, %arg2: memref<64x1xf32, #tpu.memory_space<vmem>>, %arg3: memref<16x32xbf16, #tpu.memory_space<vmem>>, %arg4: memref<1x32xf32, #tpu.memory_space<vmem>>, %arg5: memref<32x128xbf16, #tpu.memory_space<vmem>>, %arg6: memref<1x128xf32, #tpu.memory_space<vmem>>, %arg7: memref<64x128xf32, #tpu.memory_space<vmem>>) attributes {dimension_semantics = [], scalar_prefetch = 0 : i64, scratch_operands = 0 : i64, tpu.core_type = #tpu.core_type<tc>} {
    %c0 = arith.constant 0 : index
    %c0_0 = arith.constant 0 : index
    %0 = vector.load %arg0[%c0, %c0_0] : memref<64x64xi8, #tpu.memory_space<vmem>>, vector<64x64xi8>
    %1 = arith.sitofp %0 : vector<64x64xi8> to vector<64x64xf32>
    %2 = arith.truncf %1 : vector<64x64xf32> to vector<64x64xbf16>
    %c0_1 = arith.constant 0 : index
    %c0_2 = arith.constant 0 : index
    %3 = vector.load %arg2[%c0_1, %c0_2] : memref<64x1xf32, #tpu.memory_space<vmem>>, vector<64x1xf32>
    %c0_3 = arith.constant 0 : index
    %c0_4 = arith.constant 0 : index
    %4 = vector.load %arg1[%c0_3, %c0_4] : memref<64x16xbf16, #tpu.memory_space<vmem>>, vector<64x16xbf16>
    %cst = arith.constant dense<0.000000e+00> : vector<64x16xf32>
    %5 = tpu.matmul %2, %4, %cst {dimension_numbers = #tpu.dot_dimension_numbers<[1], [0], [0], [1], [0, 0, 1, 1], [], []>} : vector<64x64xbf16>, vector<64x16xbf16>, vector<64x16xf32> -> vector<64x16xf32>
    %6 = vector.broadcast %3 : vector<64x1xf32> to vector<64x16xf32>
    %7 = arith.mulf %6, %5 : vector<64x16xf32>
    %8 = arith.truncf %7 : vector<64x16xf32> to vector<64x16xbf16>
    %c0_5 = arith.constant 0 : index
    %c0_6 = arith.constant 0 : index
    %9 = vector.load %arg3[%c0_5, %c0_6] : memref<16x32xbf16, #tpu.memory_space<vmem>>, vector<16x32xbf16>
    %cst_7 = arith.constant dense<0.000000e+00> : vector<64x32xf32>
    %10 = tpu.matmul %8, %9, %cst_7 {dimension_numbers = #tpu.dot_dimension_numbers<[1], [0], [0], [1], [0, 0, 1, 1], [], []>} : vector<64x16xbf16>, vector<16x32xbf16>, vector<64x32xf32> -> vector<64x32xf32>
    %c0_8 = arith.constant 0 : index
    %c0_9 = arith.constant 0 : index
    %11 = vector.load %arg4[%c0_8, %c0_9] : memref<1x32xf32, #tpu.memory_space<vmem>>, vector<1x32xf32>
    %12 = vector.broadcast %11 : vector<1x32xf32> to vector<64x32xf32>
    %13 = arith.addf %10, %12 : vector<64x32xf32>
    %cst_10 = arith.constant 0.000000e+00 : f32
    %14 = vector.broadcast %cst_10 : f32 to vector<64x32xf32>
    %15 = arith.maximumf %13, %14 : vector<64x32xf32>
    %16 = vector.broadcast %3 : vector<64x1xf32> to vector<64x32xf32>
    %17 = arith.mulf %16, %15 : vector<64x32xf32>
    %18 = arith.truncf %17 : vector<64x32xf32> to vector<64x32xbf16>
    %cst_11 = arith.constant dense<0.000000e+00> : vector<64x32xf32>
    %19 = tpu.matmul %2, %18, %cst_11 {dimension_numbers = #tpu.dot_dimension_numbers<[1], [0], [0], [1], [0, 0, 1, 1], [], []>} : vector<64x64xbf16>, vector<64x32xbf16>, vector<64x32xf32> -> vector<64x32xf32>
    %20 = vector.broadcast %3 : vector<64x1xf32> to vector<64x32xf32>
    %21 = arith.mulf %20, %19 : vector<64x32xf32>
    %22 = arith.truncf %21 : vector<64x32xf32> to vector<64x32xbf16>
    %c0_12 = arith.constant 0 : index
    %c0_13 = arith.constant 0 : index
    %23 = vector.load %arg5[%c0_12, %c0_13] : memref<32x128xbf16, #tpu.memory_space<vmem>>, vector<32x128xbf16>
    %cst_14 = arith.constant dense<0.000000e+00> : vector<64x128xf32>
    %24 = tpu.matmul %22, %23, %cst_14 {dimension_numbers = #tpu.dot_dimension_numbers<[1], [0], [0], [1], [0, 0, 1, 1], [], []>} : vector<64x32xbf16>, vector<32x128xbf16>, vector<64x128xf32> -> vector<64x128xf32>
    %c0_15 = arith.constant 0 : index
    %c0_16 = arith.constant 0 : index
    %25 = vector.load %arg6[%c0_15, %c0_16] : memref<1x128xf32, #tpu.memory_space<vmem>>, vector<1x128xf32>
    %26 = vector.broadcast %25 : vector<1x128xf32> to vector<64x128xf32>
    %27 = arith.addf %24, %26 : vector<64x128xf32>
    %28 = tpu.iota {dimensions = array<i32: 1>} : vector<64x128xi32>
    %c8_i32 = arith.constant 8 : i32
    %29 = vector.broadcast %c8_i32 : i32 to vector<64x128xi32>
    %30 = arith.cmpi slt, %28, %29 : vector<64x128xi32>
    %cst_17 = arith.constant -1.000000e+30 : f32
    %31 = vector.broadcast %cst_17 : f32 to vector<64x128xf32>
    %32 = arith.select %30, %27, %31 : vector<64x128xi1>, vector<64x128xf32>
    %cst_18 = arith.constant dense<0xFF800000> : vector<64xf32>
    %33 = vector.multi_reduction <maximumf>, %32, %cst_18 [1] : vector<64x128xf32> to vector<64xf32>
    %34 = vector.shape_cast %33 : vector<64xf32> to vector<64x1xf32>
    %35 = vector.broadcast %34 : vector<64x1xf32> to vector<64x128xf32>
    %36 = arith.subf %32, %35 : vector<64x128xf32>
    %37 = math.exp %36 : vector<64x128xf32>
    %cst_19 = arith.constant dense<0.000000e+00> : vector<64xf32>
    %38 = vector.multi_reduction <add>, %37, %cst_19 [1] : vector<64x128xf32> to vector<64xf32>
    %39 = vector.shape_cast %38 : vector<64xf32> to vector<64x1xf32>
    %40 = math.log %39 : vector<64x1xf32>
    %41 = vector.broadcast %40 : vector<64x1xf32> to vector<64x128xf32>
    %42 = arith.subf %36, %41 : vector<64x128xf32>
    %c0_20 = arith.constant 0 : index
    %c0_21 = arith.constant 0 : index
    %43 = vector.load %arg7[%c0_20, %c0_21] : memref<64x128xf32, #tpu.memory_space<vmem>>, vector<64x128xf32>
    tpu.vector_store %arg7[%c0_20, %c0_21], %42 {strides = array<i32>} : memref<64x128xf32, #tpu.memory_space<vmem>>, vector<64x128xf32>,
    return
  }
}

</mosaic_0001>

<llo_original>
// kernel: gcn_net_forward.1
$region0: #{gcn_net_forward.1}
  #allocation0 [shape = 'u32[]', space=smem, size = 0x4, offset = 0x4, fixed_abs, tag = 'smem constant byte address 0x4 - core index']
  #allocation1 [shape = 'u32[72,128]{1,0:T(1,128)}', space=vmem, size = 0x9000, scoped, tag = 'internal scratch']
  %s0 = inlined_call_operand.vmem [shape: s8[64,64], index: 0, kind: input, shape index: {}]
  %s1 = inlined_call_operand.vmem [shape: bf16[64,16], index: 1, kind: input, shape index: {}]
  %s2 = inlined_call_operand.vmem [shape: f32[64,1], index: 2, kind: input, shape index: {}]
  %s3 = inlined_call_operand.vmem [shape: bf16[16,32], index: 3, kind: input, shape index: {}]
  %s4 = inlined_call_operand.vmem [shape: f32[1,32], index: 4, kind: input, shape index: {}]
  %s5 = inlined_call_operand.vmem [shape: bf16[32,128], index: 5, kind: input, shape index: {}]
  %s6 = inlined_call_operand.vmem [shape: f32[1,128], index: 6, kind: input, shape index: {}]
  %s7 = inlined_call_operand.vmem [shape: f32[64,128], index: 7, kind: output, shape index: {}]
  %s8 = sld [smem:[#allocation0]]
  $region38: #{gcn_net_forward.1} parent=0
    _
  %s10 = ssub.s32 1, %s8
  %s11 = scalar_select 0, %s10, %s8
  // Predicated region
  $region2: #{gcn_net_forward.1} parent=0 // pred_check
    _
  $region3: #{gcn_net_forward.1} parent=0 // pred_check_branch
    %13 = sbr.rel (0) target = $region5
  $region4: #{gcn_net_forward.1} parent=0 // pred_region
    _
  $region5: #{gcn_net_forward.1} parent=0 // pred_fallthru
    _
  // Predicated region
  $region6: #{gcn_net_forward.1} parent=0 // pred_check
    _
  $region7: #{gcn_net_forward.1} parent=0 // pred_check_branch
    %15 = sbr.rel (0) target = $region9
  $region8: #{gcn_net_forward.1} parent=0 // pred_region
    _
  $region9: #{gcn_net_forward.1} parent=0 // pred_fallthru
    _
  // Predicated region
  $region10: #{gcn_net_forward.1} parent=0 // pred_check
    _
  $region11: #{gcn_net_forward.1} parent=0 // pred_check_branch
    %17 = sbr.rel (0) target = $region13
  $region12: #{gcn_net_forward.1} parent=0 // pred_region
    _
  $region13: #{gcn_net_forward.1} parent=0 // pred_fallthru
    _
  // Predicated region
  $region14: #{gcn_net_forward.1} parent=0 // pred_check
    _
  $region15: #{gcn_net_forward.1} parent=0 // pred_check_branch
    %19 = sbr.rel (0) target = $region17
  $region16: #{gcn_net_forward.1} parent=0 // pred_region
    _
  $region17: #{gcn_net_forward.1} parent=0 // pred_fallthru
    _
  // Predicated region
  $region18: #{gcn_net_forward.1} parent=0 // pred_check
    _
  $region19: #{gcn_net_forward.1} parent=0 // pred_check_branch
    %21 = sbr.rel (0) target = $region21
  $region20: #{gcn_net_forward.1} parent=0 // pred_region
    _
  $region21: #{gcn_net_forward.1} parent=0 // pred_fallthru
    _
  // Predicated region
  $region22: #{gcn_net_forward.1} parent=0 // pred_check
    _
  $region23: #{gcn_net_forward.1} parent=0 // pred_check_branch
    %23 = sbr.rel (0) target = $region25
  $region24: #{gcn_net_forward.1} parent=0 // pred_region
    _
  $region25: #{gcn_net_forward.1} parent=0 // pred_fallthru
    _
  // Predicated region
  $region26: #{gcn_net_forward.1} parent=0 // pred_check
    _
  $region27: #{gcn_net_forward.1} parent=0 // pred_check_branch
    %25 = sbr.rel (0) target = $region29
  $region28: #{gcn_net_forward.1} parent=0 // pred_region
    _
  $region29: #{gcn_net_forward.1} parent=0 // pred_fallthru
    _
  %v27 = vld [vmem:[%s0] sm:$0xff]
  %v28 = vld [vmem:[%s0 + $0x8] sm:$0xff]
  %v29 = vunpack.c.0.s8 %v27
  %v30 = vunpack.c.1.s8 %v27
  %v31 = vunpack.c.2.s8 %v27
  %v32 = vunpack.c.3.s8 %v27
  %v33 = vunpack.c.0.s8 %v28
  %v34 = vunpack.c.1.s8 %v28
  %v35 = vunpack.c.2.s8 %v28
  %v36 = vunpack.c.3.s8 %v28
  %v37 = vcvt.s32.f32 %v29
  %v38 = vcvt.s32.f32 %v30
  %v39 = vcvt.s32.f32 %v31
  %v40 = vcvt.s32.f32 %v32
  %v41 = vcvt.s32.f32 %v33
  %v42 = vcvt.s32.f32 %v34
  %v43 = vcvt.s32.f32 %v35
  %v44 = vcvt.s32.f32 %v36
  %v45 = vpack.c.bf16 %v38, %v37
  %v46 = vpack.c.bf16 %v40, %v39
  %v47 = vpack.c.bf16 %v42, %v41
  %v48 = vpack.c.bf16 %v44, %v43
  %v49 = vld [vmem:[%s2] sm:$0xff]
  %v50 = vld [vmem:[%s2 + $0x8] sm:$0xff]
  %v51 = vld [vmem:[%s2 + $0x10] sm:$0xff]
  %v52 = vld [vmem:[%s2 + $0x18] sm:$0xff]
  %v53 = vld [vmem:[%s2 + $0x20] sm:$0xff]
  %v54 = vld [vmem:[%s2 + $0x28] sm:$0xff]
  %v55 = vld [vmem:[%s2 + $0x30] sm:$0xff]
  %v56 = vld [vmem:[%s2 + $0x38] sm:$0xff]
  %v57 = vld [vmem:[%s1] sm:$0xf]
  %v58 = vld [vmem:[%s1 + $0x4] sm:$0xf]
  %v59 = vld [vmem:[%s1 + $0x8] sm:$0xf]
  %v60 = vld [vmem:[%s1 + $0xc] sm:$0xf]
  %v61 = vld [vmem:[%s1 + $0x10] sm:$0xf]
  %v62 = vld [vmem:[%s1 + $0x14] sm:$0xf]
  %v63 = vld [vmem:[%s1 + $0x18] sm:$0xf]
  %v64 = vld [vmem:[%s1 + $0x1c] sm:$0xf]
  %v73 = vunpack.c.l.b16 %v57
  %v74 = vunpack.c.l.b16 %v58
  %v75 = vunpack.c.l.b16 %v59
  %v76 = vunpack.c.l.b16 %v60
  %v77 = vunpack.c.l.b16 %v61
  %v78 = vunpack.c.l.b16 %v62
  %v79 = vunpack.c.l.b16 %v63
  %v80 = vunpack.c.l.b16 %v64
  %v81 = vpack.c.b16 %v74, %v73
  %v82 = vpack.c.b16 %v76, %v75
  %v83 = vpack.c.b16 %v78, %v77
  %v84 = vpack.c.b16 %v80, %v79
  %vm89 = vcmask 523264
  %v91 = vsel %vm89, %v45, 0
  %v94 = vsel %vm89, %v46, 0
  %v97 = vsel %vm89, %v47, 0
  %v100 = vsel %vm89, %v48, 0
  %102 = vmatpush.bf16.msra.mxu0 0
  %103 = vmatpush.bf16.msra.mxu0 0
  %104 = vmatpush.bf16.msra.mxu0 0
  %105 = vmatpush.bf16.msra.mxu0 0
  %106 = vmatpush.bf16.msra.mxu0 %v84
  %107 = vmatpush.bf16.msra.mxu0 %v83
  %108 = vmatpush.bf16.msra.mxu0 %v82
  %109 = vmatpush.bf16.msra.mxu0 %v81
  %110 = vmatmul.bf16.gmra.mxu0 %v91
  %v111 = vpop.f32.mrf.mxu0
  %v112 = vadd.f32 0.0, %v111
  %v113 = vpop.f32.mrf.mxu0
  %v114 = vadd.f32 0.0, %v113
  %115 = vmatmul.bf16.gmra.mxu0 %v94
  %v116 = vpop.f32.mrf.mxu0
  %v117 = vadd.f32 0.0, %v116
  %v118 = vpop.f32.mrf.mxu0
  %v119 = vadd.f32 0.0, %v118
  %120 = vmatmul.bf16.gmra.mxu0 %v97
  %v121 = vpop.f32.mrf.mxu0
  %v122 = vadd.f32 0.0, %v121
  %v123 = vpop.f32.mrf.mxu0
  %v124 = vadd.f32 0.0, %v123
  %125 = vmatmul.bf16.gmra.mxu0 %v100
  %v126 = vpop.f32.mrf.mxu0
  %v127 = vadd.f32 0.0, %v126
  %v128 = vpop.f32.mrf.mxu0
  %v129 = vadd.f32 0.0, %v128
  %130 = vdwg.mxu0
  %132 = vset.pattern.permute.xlu0 0
  %133 = vperm.xlu0 %132, %v49
  %v134 = vpop.permute.xlu0 %133
  %137 = vset.pattern.permute.xlu0 0
  %138 = vperm.xlu0 %137, %v50
  %v139 = vpop.permute.xlu0 %138
  %142 = vset.pattern.permute.xlu0 0
  %143 = vperm.xlu0 %142, %v51
  %v144 = vpop.permute.xlu0 %143
  %147 = vset.pattern.permute.xlu0 0
  %148 = vperm.xlu0 %147, %v52
  %v149 = vpop.permute.xlu0 %148
  %152 = vset.pattern.permute.xlu0 0
  %153 = vperm.xlu0 %152, %v53
  %v154 = vpop.permute.xlu0 %153
  %157 = vset.pattern.permute.xlu0 0
  %158 = vperm.xlu0 %157, %v54
  %v159 = vpop.permute.xlu0 %158
  %162 = vset.pattern.permute.xlu0 0
  %163 = vperm.xlu0 %162, %v55
  %v164 = vpop.permute.xlu0 %163
  %167 = vset.pattern.permute.xlu0 0
  %168 = vperm.xlu0 %167, %v56
  %v169 = vpop.permute.xlu0 %168
  %v171 = vmul.f32 %v134, %v112
  %v172 = vmul.f32 %v139, %v114
  %v173 = vmul.f32 %v144, %v117
  %v174 = vmul.f32 %v149, %v119
  %v175 = vmul.f32 %v154, %v122
  %v176 = vmul.f32 %v159, %v124
  %v177 = vmul.f32 %v164, %v127
  %v178 = vmul.f32 %v169, %v129
  %v179 = vpack.c.bf16 %v172, %v171
  %v180 = vpack.c.bf16 %v174, %v173
  %v181 = vpack.c.bf16 %v176, %v175
  %v182 = vpack.c.bf16 %v178, %v177
  %v183 = vld [vmem:[%s3] sm:$0xf]
  %v184 = vld [vmem:[%s3 + $0x4] sm:$0xf]
  %v185 = vld [vmem:[%s4] sm:$0x1]
  %v187 = vperm.slane %v185, 0
  %v191 = vunpack.c.l.b16 %v183
  %v192 = vunpack.c.l.b16 %v184
  %v193 = vpack.c.b16 %v192, %v191
  %vm195 = vcmask 130048
  %v197 = vsel %vm195, %v179, 0
  %v200 = vsel %vm195, %v180, 0
  %v203 = vsel %vm195, %v181, 0
  %v206 = vsel %vm195, %v182, 0
  %208 = vmatpush.bf16.msra.mxu0 0
  %209 = vmatpush.bf16.msra.mxu0 0
  %210 = vmatpush.bf16.msra.mxu0 0
  %211 = vmatpush.bf16.msra.mxu0 0
  %212 = vmatpush.bf16.msra.mxu0 0
  %213 = vmatpush.bf16.msra.mxu0 0
  %214 = vmatpush.bf16.msra.mxu0 0
  %215 = vmatpush.bf16.msra.mxu0 %v193
  %216 = vmatmul.bf16.gmra.mxu0 %v197
  %v217 = vpop.f32.mrf.mxu0
  %v218 = vadd.f32 %v187, %v217
  %v219 = vpop.f32.mrf.mxu0
  %v220 = vadd.f32 %v187, %v219
  %221 = vmatmul.bf16.gmra.mxu0 %v200
  %v222 = vpop.f32.mrf.mxu0
  %v223 = vadd.f32 %v187, %v222
  %v224 = vpop.f32.mrf.mxu0
  %v225 = vadd.f32 %v187, %v224
  %226 = vmatmul.bf16.gmra.mxu0 %v203
  %v227 = vpop.f32.mrf.mxu0
  %v228 = vadd.f32 %v187, %v227
  %v229 = vpop.f32.mrf.mxu0
  %v230 = vadd.f32 %v187, %v229
  %231 = vmatmul.bf16.gmra.mxu0 %v206
  %v232 = vpop.f32.mrf.mxu0
  %v233 = vadd.f32 %v187, %v232
  %v234 = vpop.f32.mrf.mxu0
  %v235 = vadd.f32 %v187, %v234
  %236 = vdwg.mxu0
  %v237 = vmax.f32 %v218, 0.0
  %v238 = vmax.f32 %v220, 0.0
  %v239 = vmax.f32 %v223, 0.0
  %v240 = vmax.f32 %v225, 0.0
  %v241 = vmax.f32 %v228, 0.0
  %v242 = vmax.f32 %v230, 0.0
  %v243 = vmax.f32 %v233, 0.0
  %v244 = vmax.f32 %v235, 0.0
  %v245 = vmul.f32 %v134, %v237
  %v246 = vmul.f32 %v139, %v238
  %v247 = vmul.f32 %v144, %v239
  %v248 = vmul.f32 %v149, %v240
  %v249 = vmul.f32 %v154, %v241
  %v250 = vmul.f32 %v159, %v242
  %v251 = vmul.f32 %v164, %v243
  %v252 = vmul.f32 %v169, %v244
  %v253 = vpack.c.bf16 %v246, %v245
  %v254 = vpack.c.bf16 %v248, %v247
  %v255 = vpack.c.bf16 %v250, %v249
  %v256 = vpack.c.bf16 %v252, %v251
  %257 = vmatpush.bf16.msra.mxu0 0
  %258 = vmatpush.bf16.msra.mxu0 0
  %259 = vmatpush.bf16.msra.mxu0 0
  %260 = vmatpush.bf16.msra.mxu0 0
  %261 = vmatpush.bf16.msra.mxu0 %v256
  %262 = vmatpush.bf16.msra.mxu0 %v255
  %263 = vmatpush.bf16.msra.mxu0 %v254
  %264 = vmatpush.bf16.msra.mxu0 %v253
  %265 = vmatmul.bf16.gmra.mxu0 %v91
  %v266 = vpop.f32.mrf.mxu0
  %v267 = vadd.f32 0.0, %v266
  %v268 = vpop.f32.mrf.mxu0
  %v269 = vadd.f32 0.0, %v268
  %270 = vmatmul.bf16.gmra.mxu0 %v94
  %v271 = vpop.f32.mrf.mxu0
  %v272 = vadd.f32 0.0, %v271
  %v273 = vpop.f32.mrf.mxu0
  %v274 = vadd.f32 0.0, %v273
  %275 = vmatmul.bf16.gmra.mxu0 %v97
  %v276 = vpop.f32.mrf.mxu0
  %v277 = vadd.f32 0.0, %v276
  %v278 = vpop.f32.mrf.mxu0
  %v279 = vadd.f32 0.0, %v278
  %280 = vmatmul.bf16.gmra.mxu0 %v100
  %v281 = vpop.f32.mrf.mxu0
  %v282 = vadd.f32 0.0, %v281
  %v283 = vpop.f32.mrf.mxu0
  %v284 = vadd.f32 0.0, %v283
  %285 = vdwg.mxu0
  %v286 = vmul.f32 %v134, %v267
  %v287 = vmul.f32 %v139, %v269
  %v288 = vmul.f32 %v144, %v272
  %v289 = vmul.f32 %v149, %v274
  %v290 = vmul.f32 %v154, %v277
  %v291 = vmul.f32 %v159, %v279
  %v292 = vmul.f32 %v164, %v282
  %v293 = vmul.f32 %v169, %v284
  %v294 = vpack.c.bf16 %v287, %v286
  %v295 = vpack.c.bf16 %v289, %v288
  %v296 = vpack.c.bf16 %v291, %v290
  %v297 = vpack.c.bf16 %v293, %v292
  %v298 = vld [vmem:[%s5] sm:$0xf]
  %v299 = vld [vmem:[%s5 + $0x4] sm:$0xf]
  %v300 = vld [vmem:[%s5 + $0x8] sm:$0xf]
  %v301 = vld [vmem:[%s5 + $0xc] sm:$0xf]
  %v302 = vld [vmem:[%s6] sm:$0x1]
  %v304 = vperm.slane %v302, 0
  %v310 = vunpack.c.l.b16 %v298
  %v311 = vunpack.c.l.b16 %v299
  %v312 = vunpack.c.l.b16 %v300
  %v313 = vunpack.c.l.b16 %v301
  %v314 = vpack.c.b16 %v311, %v310
  %v315 = vpack.c.b16 %v313, %v312
  %vm318 = vcmask 261120
  %v320 = vsel %vm318, %v294, 0
  %v323 = vsel %vm318, %v295, 0
  %v326 = vsel %vm318, %v296, 0
  %v329 = vsel %vm318, %v297, 0
  %331 = vmatpush.bf16.msra.mxu0 0
  %332 = vmatpush.bf16.msra.mxu0 0
  %333 = vmatpush.bf16.msra.mxu0 0
  %334 = vmatpush.bf16.msra.mxu0 0
  %335 = vmatpush.bf16.msra.mxu0 0
  %336 = vmatpush.bf16.msra.mxu0 0
  %337 = vmatpush.bf16.msra.mxu0 %v315
  %338 = vmatpush.bf16.msra.mxu0 %v314
  %339 = vmatmul.bf16.gmra.mxu0 %v320
  %v340 = vpop.f32.mrf.mxu0
  %v341 = vadd.f32 %v304, %v340
  %v342 = vpop.f32.mrf.mxu0
  %v343 = vadd.f32 %v304, %v342
  %344 = vmatmul.bf16.gmra.mxu0 %v323
  %v345 = vpop.f32.mrf.mxu0
  %v346 = vadd.f32 %v304, %v345
  %v347 = vpop.f32.mrf.mxu0
  %v348 = vadd.f32 %v304, %v347
  %349 = vmatmul.bf16.gmra.mxu0 %v326
  %v350 = vpop.f32.mrf.mxu0
  %v351 = vadd.f32 %v304, %v350
  %v352 = vpop.f32.mrf.mxu0
  %v353 = vadd.f32 %v304, %v352
  %354 = vmatmul.bf16.gmra.mxu0 %v329
  %v355 = vpop.f32.mrf.mxu0
  %v356 = vadd.f32 %v304, %v355
  %v357 = vpop.f32.mrf.mxu0
  %v358 = vadd.f32 %v304, %v357
  %359 = vdwg.mxu0
  %v360 = vlaneseq
  %v361 = vand.u32 %v360, 127
  %vm362 = vcmp.lt.s32.totalorder %v361, 8
  %v363 = vsel %vm362, %v341, -1e+30
  %v364 = vsel %vm362, %v343, -1e+30
  %v365 = vsel %vm362, %v346, -1e+30
  %v366 = vsel %vm362, %v348, -1e+30
  %v367 = vsel %vm362, %v351, -1e+30
  %v368 = vsel %vm362, %v353, -1e+30
  %v369 = vsel %vm362, %v356, -1e+30
  %v370 = vsel %vm362, %v358, -1e+30
  %371 = vmax.xlane.f32.xlu0 %v363
  %v372 = vpop.xlane.xlu0 %371
  %373 = vmax.xlane.f32.xlu0 %v364
  %v374 = vpop.xlane.xlu0 %373
  %375 = vmax.xlane.f32.xlu0 %v365
  %v376 = vpop.xlane.xlu0 %375
  %377 = vmax.xlane.f32.xlu0 %v366
  %v378 = vpop.xlane.xlu0 %377
  %379 = vmax.xlane.f32.xlu0 %v367
  %v380 = vpop.xlane.xlu0 %379
  %381 = vmax.xlane.f32.xlu0 %v368
  %v382 = vpop.xlane.xlu0 %381
  %383 = vmax.xlane.f32.xlu0 %v369
  %v384 = vpop.xlane.xlu0 %383
  %385 = vmax.xlane.f32.xlu0 %v370
  %v386 = vpop.xlane.xlu0 %385
  %v387 = vsub.f32 %v363, %v372
  %v388 = vsub.f32 %v364, %v374
  %v389 = vsub.f32 %v365, %v376
  %v390 = vsub.f32 %v366, %v378
  %v391 = vsub.f32 %v367, %v380
  %v392 = vsub.f32 %v368, %v382
  %v393 = vsub.f32 %v369, %v384
  %v394 = vsub.f32 %v370, %v386
  %v395 = vmul.f32 %v387, 1.442695
  %v396 = vpow.pop %v395
  %v397 = vmul.f32 %v388, 1.442695
  %v398 = vpow.pop %v397
  %v399 = vmul.f32 %v389, 1.442695
  %v400 = vpow.pop %v399
  %v401 = vmul.f32 %v390, 1.442695
  %v402 = vpow.pop %v401
  %v403 = vmul.f32 %v391, 1.442695
  %v404 = vpow.pop %v403
  %v405 = vmul.f32 %v392, 1.442695
  %v406 = vpow.pop %v405
  %v407 = vmul.f32 %v393, 1.442695
  %v408 = vpow.pop %v407
  %v409 = vmul.f32 %v394, 1.442695
  %v410 = vpow.pop %v409
  %411 = vadd.xlane.f32.xlu0 %v396
  %v412 = vpop.xlane.xlu0 %411
  %413 = vadd.xlane.f32.xlu0 %v398
  %v414 = vpop.xlane.xlu0 %413
  %415 = vadd.xlane.f32.xlu0 %v400
  %v416 = vpop.xlane.xlu0 %415
  %417 = vadd.xlane.f32.xlu0 %v402
  %v418 = vpop.xlane.xlu0 %417
  %419 = vadd.xlane.f32.xlu0 %v404
  %v420 = vpop.xlane.xlu0 %419
  %421 = vadd.xlane.f32.xlu0 %v406
  %v422 = vpop.xlane.xlu0 %421
  %423 = vadd.xlane.f32.xlu0 %v408
  %v424 = vpop.xlane.xlu0 %423
  %425 = vadd.xlane.f32.xlu0 %v410
  %v426 = vpop.xlane.xlu0 %425
  %v427 = vlog2.pop %v412
  %v428 = vmul.f32 %v427, 0.6931472
  %v429 = vlog2.pop %v414
  %v430 = vmul.f32 %v429, 0.6931472
  %v431 = vlog2.pop %v416
  %v432 = vmul.f32 %v431, 0.6931472
  %v433 = vlog2.pop %v418
  %v434 = vmul.f32 %v433, 0.6931472
  %v435 = vlog2.pop %v420
  %v436 = vmul.f32 %v435, 0.6931472
  %v437 = vlog2.pop %v422
  %v438 = vmul.f32 %v437, 0.6931472
  %v439 = vlog2.pop %v424
  %v440 = vmul.f32 %v439, 0.6931472
  %v441 = vlog2.pop %v426
  %v442 = vmul.f32 %v441, 0.6931472
  %v443 = vsub.f32 %v387, %v428
  %v444 = vsub.f32 %v388, %v430
  %v445 = vsub.f32 %v389, %v432
  %v446 = vsub.f32 %v390, %v434
  %v447 = vsub.f32 %v391, %v436
  %v448 = vsub.f32 %v392, %v438
  %v449 = vsub.f32 %v393, %v440
  %v450 = vsub.f32 %v394, %v442
  %451 = vst [vmem:[%s7] sm:$0xff] %v443
  %452 = vst [vmem:[%s7 + $0x8] sm:$0xff] %v444
  %453 = vst [vmem:[%s7 + $0x10] sm:$0xff] %v445
  %454 = vst [vmem:[%s7 + $0x18] sm:$0xff] %v446
  %455 = vst [vmem:[%s7 + $0x20] sm:$0xff] %v447
  %456 = vst [vmem:[%s7 + $0x28] sm:$0xff] %v448
  %457 = vst [vmem:[%s7 + $0x30] sm:$0xff] %v449
  %458 = vst [vmem:[%s7 + $0x38] sm:$0xff] %v450
  // Predicated region
  $region30: #{gcn_net_forward.1} parent=0 // pred_check
    _
  $region31: #{gcn_net_forward.1} parent=0 // pred_check_branch
    %460 = sbr.rel (0) target = $region33
  $region32: #{gcn_net_forward.1} parent=0 // pred_region
    _
  $region33: #{gcn_net_forward.1} parent=0 // pred_fallthru
    _
  // Predicated region
  $region34: #{gcn_net_forward.1} parent=0 // pred_check
    _
  $region35: #{gcn_net_forward.1} parent=0 // pred_check_branch
    %462 = sbr.rel (0) target = $region37
  $region36: #{gcn_net_forward.1} parent=0 // pred_region
    _
  $region37: #{gcn_net_forward.1} parent=0 // pred_fallthru
    _

</llo_original>
